<compile_context>
chip_gen: v5e
topology: v5e:2x2
jax: 0.10.0
libtpu: 0.0.40
codegen_flags: <defaults>
</compile_context>

<pallas_src>
import numpy as np
import jax
import jax.numpy as jnp
from jax import lax
from jax.experimental import pallas as pl
from jax.experimental.pallas import tpu as pltpu


def _bilinear_matrix_np(in_size: int, out_size: int) -> np.ndarray:
    """(out_size, in_size) classic bilinear interpolation matrix (align_corners=False).

    Built with numpy on the host - avoids per-call on-device one_hot construction.
    """
    i = np.arange(out_size, dtype=np.float64)
    src = np.maximum((i + 0.5) * (in_size / out_size) - 0.5, 0.0)
    i0 = np.floor(src).astype(np.int64)
    i1 = np.minimum(i0 + 1, in_size - 1)
    w1 = (src - i0).astype(np.float32)
    w0 = (1.0 - w1).astype(np.float32)
    m = np.zeros((out_size, in_size), dtype=np.float32)
    rows = np.arange(out_size)
    m[rows, i0] += w0
    m[rows, i1] += w1      # i0 == i1 at the clamped edge -> weights sum to 1
    return m


def _resize_kernel(x_ref, wh_ref, ww_ref, o_ref):
    """Bilinearly resize TB image planes.

    x_ref : (TB, H, W)             input planes, native dtype (cast in-kernel)
    wh_ref: (out_h, H)             height interpolation matrix (compute dtype)
    ww_ref: (W, out_w_pad)         width interpolation matrix, pre-transposed + lane-padded
    o_ref : (TB, out_h, out_w_pad)
    """
    tb = x_ref.shape[0]
    cdt = ww_ref.dtype
    wh = wh_ref[...]
    ww = ww_ref[...]

    is_int = jnp.issubdtype(o_ref.dtype, jnp.integer)
    iinfo = jnp.iinfo(o_ref.dtype) if is_int else None

    def one_plane(t):
        xt = x_ref[t].astype(cdt)                                             # (H, W)
        # Width pass: lane-dense matmul (out_w_pad % 128 == 0 -> unmasked stores later).
        yt = jnp.dot(xt, ww, preferred_element_type=jnp.float32)              # (H, OWp)
        # Height pass: weights as LHS; no broadcast, no transpose, no reshape.
        ot = jnp.dot(wh, yt.astype(cdt), preferred_element_type=jnp.float32)  # (out_h, OWp)
        if is_int:
            # TODO(synk): torch's uint8 path rounds half away from zero; this uses
            #             round-half-to-even + clamp (differs only on exact .5 ties).
            ot = jnp.clip(jnp.round(ot), float(iinfo.min), float(iinfo.max))
        o_ref[t] = ot.astype(o_ref.dtype)

    if tb <= 8:
        # Small static trip count: full unroll for scheduler visibility.
        for t in range(tb):
            one_plane(t)
    else:
        def body(t, carry):
            one_plane(t)
            return carry
        lax.fori_loop(0, tb, body, 0)


def height_resize(x: jnp.ndarray, target_height: int, *,
                  compute_dtype=None, max_tb: int = 32) -> jnp.ndarray:
    """Pallas equivalent of HeightResize.forward for an NCHW tensor."""
    N, C, H, W = x.shape
    # F.get_image_size returns (width, height); scale = target_height / height.
    scale = target_height / H
    out_h = max(int(target_height), 1)   # H * (target/H) == target; avoid float truncation bug
    out_w = max(int(W * scale), 1)       # same truncation as the reference for the width

    # Precision knob: bf16 MXU-native path for low-precision inputs, exact f32 for f32.
    if compute_dtype is None:
        if x.dtype == jnp.bfloat16 or jnp.issubdtype(x.dtype, jnp.integer):
            compute_dtype = jnp.bfloat16
        else:
            compute_dtype = jnp.float32
    compute_dtype = jnp.dtype(compute_dtype)

    # Host-built interpolation matrices.
    wh = _bilinear_matrix_np(H, out_h)           # (out_h, H)
    ww = _bilinear_matrix_np(W, out_w).T         # (W, out_w)

    # Lane-pad output width to a multiple of 128 (unmasked vst); padded zero-weight
    # columns are sliced off in plain JAX below.
    out_w_pad = ((out_w + 127) // 128) * 128
    if out_w_pad != out_w:
        ww = np.pad(ww, ((0, 0), (0, out_w_pad - out_w)))
    wh_dev = jnp.asarray(wh, dtype=compute_dtype)
    ww_dev = jnp.asarray(ww, dtype=compute_dtype)

    nc = N * C
    x_flat = x.reshape(nc, H, W)                 # native dtype; NO host-side f32 upcast

    # ---- VMEM accounting & TB (planes per grid step) selection --------------------
    vmem_cap = 64 << 20                          # conservative default (v7x)
    try:
        tpu_info = pltpu.get_tpu_info()
        vmem_cap = int(getattr(tpu_info, "vmem_capacity_bytes", vmem_cap))
    except Exception:
        pass

    itm = x.dtype.itemsize
    cbytes = compute_dtype.itemsize
    # Double-buffered input/output blocks per plane (BlockSpec pipelining).
    per_plane = 2 * H * W * itm + 2 * out_h * out_w_pad * itm
    # Weights counted double-buffered even with constant index maps, plus per-plane
    # in-kernel temporaries (cast input, f32 width result, f32 output tile).
    weights_bytes = 2 * cbytes * (out_h * H + W * out_w_pad)
    kernel_temps = (cbytes * H * W + 4 * H * out_w_pad + cbytes * H * out_w_pad
                    + 4 * out_h * out_w_pad)
    slack = kernel_temps + (2 << 20)

    budget = min(int(vmem_cap * 0.5), 100 << 20)     # ~32 MiB on v7x, ~64 MiB on v5e/v6e
    tb = max(1, (budget - weights_bytes - slack) // max(per_plane, 1))
    tb = int(min(tb, nc, max_tb))
    # Keep >= 4 grid steps when nc allows: megacore balance on v7x + DMA/compute overlap.
    tb = max(1, min(tb, max(1, nc // 4)))

    nc_pad = ((nc + tb - 1) // tb) * tb
    if nc_pad != nc:
        x_flat = jnp.pad(x_flat, ((0, nc_pad - nc), (0, 0), (0, 0)))

    vmem_limit = tb * per_plane + weights_bytes + slack + (4 << 20)
    vmem_limit = int(min(max(vmem_limit, 16 << 20), int(vmem_cap * 0.9)))

    out_flat = pl.pallas_call(
        _resize_kernel,
        out_shape=jax.ShapeDtypeStruct((nc_pad, out_h, out_w_pad), x.dtype),
        grid=(nc_pad // tb,),
        in_specs=[
            pl.BlockSpec((tb, H, W), lambda i: (i, 0, 0)),
            pl.BlockSpec((out_h, H), lambda i: (0, 0)),        # constant map -> VMEM resident
            pl.BlockSpec((W, out_w_pad), lambda i: (0, 0)),    # constant map -> VMEM resident
        ],
        out_specs=pl.BlockSpec((tb, out_h, out_w_pad), lambda i: (i, 0, 0)),
        compiler_params=pltpu.CompilerParams(
            dimension_semantics=("parallel",),                 # independent planes
            vmem_limit_bytes=vmem_limit,
        ),
    )(x_flat, wh_dev, ww_dev)

    return out_flat[:nc, :, :out_w].reshape(N, C, out_h, out_w)


if __name__ == "__main__":
    key = jax.random.PRNGKey(0)
    N, C, H, W = 2, 4, 16, 16
    target_height = 24  # module __init__ arg

    x = jax.random.normal(key, (N, C, H, W), dtype=jnp.float32)

    y = height_resize(x, target_height)
    y = jax.block_until_ready(y)

    expected_h = int(target_height)
    expected_w = int(W * (target_height / H))
    assert y.shape == (N, C, expected_h, expected_w), y.shape
    assert y.dtype == x.dtype

    # Independent reference (same half-pixel bilinear convention; upsampling so antialias
    # is a no-op). Loose tolerance covers XLA's default reduced matmul precision.
    ref = jax.image.resize(x, (N, C, expected_h, expected_w), method="bilinear")
    max_err = float(jnp.max(jnp.abs(y - ref)))
    assert max_err < 5e-2, max_err

    print("KERNEL_OK")
</pallas_src>

<mosaic_0001>
module attributes {stable_mosaic.version = 11 : i64} {
  func.func @_resize_kernel(%arg0: i32, %arg1: memref<2x16x16xf32, #tpu.memory_space<vmem>>, %arg2: memref<24x16xf32, #tpu.memory_space<vmem>>, %arg3: memref<16x128xf32, #tpu.memory_space<vmem>>, %arg4: memref<2x24x128xf32, #tpu.memory_space<vmem>>) attributes {dimension_semantics = [#tpu.dimension_semantics<parallel>], iteration_bounds = array<i64: 4>, scalar_prefetch = 0 : i64, scratch_operands = 0 : i64, tpu.core_type = #tpu.core_type<tc>, window_params = [{transform_indices = @transform_0, window_bounds = array<i64: 2, 16, 16>}, {pipeline_mode = #tpu.pipeline_mode<synchronous>, transform_indices = @transform_1, window_bounds = array<i64: 24, 16>}, {pipeline_mode = #tpu.pipeline_mode<synchronous>, transform_indices = @transform_2, window_bounds = array<i64: 16, 128>}, {transform_indices = @transform_3, window_bounds = array<i64: 2, 24, 128>}]} {
    %c0 = arith.constant 0 : index
    %c0_0 = arith.constant 0 : index
    %0 = vector.load %arg2[%c0, %c0_0] : memref<24x16xf32, #tpu.memory_space<vmem>>, vector<24x16xf32>
    %c0_1 = arith.constant 0 : index
    %c0_2 = arith.constant 0 : index
    %1 = vector.load %arg3[%c0_1, %c0_2] : memref<16x128xf32, #tpu.memory_space<vmem>>, vector<16x128xf32>
    %c0_3 = arith.constant 0 : index
    %c0_4 = arith.constant 0 : index
    %c0_5 = arith.constant 0 : index
    %2 = vector.load %arg1[%c0_3, %c0_4, %c0_5] : memref<2x16x16xf32, #tpu.memory_space<vmem>>, vector<1x16x16xf32>
    %3 = vector.shape_cast %2 : vector<1x16x16xf32> to vector<16x16xf32>
    %cst = arith.constant dense<0.000000e+00> : vector<16x128xf32>
    %4 = tpu.matmul %3, %1, %cst {dimension_numbers = #tpu.dot_dimension_numbers<[1], [0], [0], [1], [0, 0, 1, 1], [], []>} : vector<16x16xf32>, vector<16x128xf32>, vector<16x128xf32> -> vector<16x128xf32>
    %cst_6 = arith.constant dense<0.000000e+00> : vector<24x128xf32>
    %5 = tpu.matmul %0, %4, %cst_6 {dimension_numbers = #tpu.dot_dimension_numbers<[1], [0], [0], [1], [0, 0, 1, 1], [], []>} : vector<24x16xf32>, vector<16x128xf32>, vector<24x128xf32> -> vector<24x128xf32>
    %c0_7 = arith.constant 0 : index
    %c0_8 = arith.constant 0 : index
    %c0_9 = arith.constant 0 : index
    %6 = vector.load %arg4[%c0_7, %c0_8, %c0_9] : memref<2x24x128xf32, #tpu.memory_space<vmem>>, vector<1x24x128xf32>
    %7 = vector.shape_cast %6 : vector<1x24x128xf32> to vector<24x128xf32>
    %8 = vector.shape_cast %5 : vector<24x128xf32> to vector<1x24x128xf32>
    tpu.vector_store %arg4[%c0_7, %c0_8, %c0_9], %8 {strides = array<i32>} : memref<2x24x128xf32, #tpu.memory_space<vmem>>, vector<1x24x128xf32>,
    %c1 = arith.constant 1 : index
    %c0_10 = arith.constant 0 : index
    %c0_11 = arith.constant 0 : index
    %9 = vector.load %arg1[%c1, %c0_10, %c0_11] : memref<2x16x16xf32, #tpu.memory_space<vmem>>, vector<1x16x16xf32>
    %10 = vector.shape_cast %9 : vector<1x16x16xf32> to vector<16x16xf32>
    %cst_12 = arith.constant dense<0.000000e+00> : vector<16x128xf32>
    %11 = tpu.matmul %10, %1, %cst_12 {dimension_numbers = #tpu.dot_dimension_numbers<[1], [0], [0], [1], [0, 0, 1, 1], [], []>} : vector<16x16xf32>, vector<16x128xf32>, vector<16x128xf32> -> vector<16x128xf32>
    %cst_13 = arith.constant dense<0.000000e+00> : vector<24x128xf32>
    %12 = tpu.matmul %0, %11, %cst_13 {dimension_numbers = #tpu.dot_dimension_numbers<[1], [0], [0], [1], [0, 0, 1, 1], [], []>} : vector<24x16xf32>, vector<16x128xf32>, vector<24x128xf32> -> vector<24x128xf32>
    %c1_14 = arith.constant 1 : index
    %c0_15 = arith.constant 0 : index
    %c0_16 = arith.constant 0 : index
    %13 = vector.load %arg4[%c1_14, %c0_15, %c0_16] : memref<2x24x128xf32, #tpu.memory_space<vmem>>, vector<1x24x128xf32>
    %14 = vector.shape_cast %13 : vector<1x24x128xf32> to vector<24x128xf32>
    %15 = vector.shape_cast %12 : vector<24x128xf32> to vector<1x24x128xf32>
    tpu.vector_store %arg4[%c1_14, %c0_15, %c0_16], %15 {strides = array<i32>} : memref<2x24x128xf32, #tpu.memory_space<vmem>>, vector<1x24x128xf32>,
    return
  }
  func.func @transform_0(%arg0: i32) -> (i32, i32, i32) {
    %c0_i32 = arith.constant 0 : i32
    %c0_i32_0 = arith.constant 0 : i32
    %c0_i32_1 = arith.constant 0 : i32
    return %arg0, %c0_i32, %c0_i32_0 : i32, i32, i32
  }
  func.func @transform_1(%arg0: i32) -> (i32, i32) {
    %c0_i32 = arith.constant 0 : i32
    %c0_i32_0 = arith.constant 0 : i32
    %c0_i32_1 = arith.constant 0 : i32
    return %c0_i32, %c0_i32_0 : i32, i32
  }
  func.func @transform_2(%arg0: i32) -> (i32, i32) {
    %c0_i32 = arith.constant 0 : i32
    %c0_i32_0 = arith.constant 0 : i32
    %c0_i32_1 = arith.constant 0 : i32
    return %c0_i32, %c0_i32_0 : i32, i32
  }
  func.func @transform_3(%arg0: i32) -> (i32, i32, i32) {
    %c0_i32 = arith.constant 0 : i32
    %c0_i32_0 = arith.constant 0 : i32
    %c0_i32_1 = arith.constant 0 : i32
    return %arg0, %c0_i32, %c0_i32_0 : i32, i32, i32
  }
}

</mosaic_0001>

<llo_original>
// kernel: tpu_custom_call.1
$region0: #{tpu_custom_call.1}
  #allocation0 [shape = 'u32[]', space=smem, size = 0x4, offset = 0x4, fixed_abs, tag = 'smem constant byte address 0x4 - core index']
  #allocation1 [shape = 'u32[72,128]{1,0:T(1,128)}', space=vmem, size = 0x9000, scoped, tag = 'internal scratch']
  %s0 = inlined_call_operand.hbm [shape: f32[8,16,16], index: 0, kind: input, shape index: {}]
  %s1 = inlined_call_operand.vmem [shape: f32[24,16], index: 1, kind: input, shape index: {}]
  %s2 = inlined_call_operand.vmem [shape: f32[16,128], index: 2, kind: input, shape index: {}]
  %s3 = inlined_call_operand.hbm [shape: f32[8,24,128], index: 3, kind: output, shape index: {}]
  %s4 = sld [smem:[#allocation0]]
  $region49: #{tpu_custom_call.1} parent=0
    _
  %s6 = ssub.s32 1, %s4
  %s7 = scalar_select 0, %s6, %s4
  $region1: #{tpu_custom_call.1} parent=0
    #allocation2 [shape = 'u8[32768]{0}', space=vmem, size = 0x8000, scoped, tag = 'input window, operand 0']
    #allocation3 [shape = 's32[2]{0}', space=sflag, size = 0x8, scoped, tag = 'scoped memory for tpu_custom_call.1']
    #allocation4 [shape = 's32[2]{0}', space=sflag, size = 0x8, scoped, tag = 'scoped memory for tpu_custom_call.1']
    #allocation5 [shape = 'u8[49152]{0}', space=vmem, size = 0xc000, scoped, tag = 'output window, operand 0']
    %8 = vsyncpa [#allocation3], 0
    %s9 = scalar_lea.sflag [#allocation3], 1
    %10 = vsyncpa %s9, 0
    %11 = vsyncpa [#allocation4], 0
    %s12 = scalar_lea.sflag [#allocation4], 1
    %13 = vsyncpa %s12, 0
    loop: start=0, step=1, limit=6
    $region2: #{tpu_custom_call.1} parent=1 // loop_pre_header
      _
    $region3: #{tpu_custom_call.1} parent=1 // loop_header
      %s15 = sphi 0, %s19
      %p16 = scmp.ge.s32.totalorder %s15, 6
      %s25 = sphi 0, %s27
      %s28 = sphi 0, %s25
      %s29 = sphi 0, %s28
      %s45 = sphi 0, %s29
      %s49 = sphi 0, %s49
      %s51 = sphi 0, %s49
      %s52 = sphi 0, %s51
      %s66 = sphi 0, %s52
      %s70 = sphi 0, %s70
      %s72 = sphi 0, %s70
      %s73 = sphi 0, %s72
      %s87 = sphi 0, %s73
      %s93 = sphi 0, %s95
      %s96 = sphi 0, %s93
      %s97 = sphi 0, %s96
      %s113 = sphi 0, %s97
    $region4: #{tpu_custom_call.1} parent=1 // loop_header_branch
      %18 = sbr.rel (%p16) target = $region8
    $region5: #{tpu_custom_call.1} parent=1 // loop_body
      %s20 = ssub.s32 %s15, 1
      %s21 = ssub.s32 %s15, 2
      %s22 = sadd.s32 %s15, 1
      %s23 = ssub.s32 %s15, %s22
      %p24 = scmp.eq.s32.totalorder %s23, 0
      %s26 = sadd.s32 %s25, 1
      %s27 = scalar_select %p24, %s25, %s26
      %p30 = pneg %p24
      %p31 = scmp.eq.s32.totalorder %s15, 3
      %p32 = por %p30, %p31
      %p33 = scmp.ne.s32.totalorder %s25, %s28
      %p34 = scmp.eq.s32.totalorder %s15, 0
      %p35 = por %p33, %p34
      %p36 = scmp.ne.s32.totalorder %s25, %s28
      %p37 = scmp.eq.s32.totalorder %s20, 3
      %p38 = por %p36, %p37
      %p39 = scmp.ne.s32.totalorder %s28, %s29
      %p40 = scmp.eq.s32.totalorder %s20, 0
      %p41 = por %p39, %p40
      %p42 = scmp.ne.s32.totalorder %s28, %s29
      %p43 = scmp.eq.s32.totalorder %s21, 3
      %p44 = por %p42, %p43
      %p46 = scmp.ne.s32.totalorder %s29, %s45
      %p47 = scmp.eq.s32.totalorder %s21, 0
      %p48 = por %p46, %p47
      %s50 = sadd.s32 %s49, 1
      %p53 = scmp.eq.s32.totalorder %s15, 3
      %p54 = scmp.ne.s32.totalorder %s49, %s51
      %p55 = scmp.eq.s32.totalorder %s15, 0
      %p56 = por %p54, %p55
      %p57 = scmp.ne.s32.totalorder %s49, %s51
      %p58 = scmp.eq.s32.totalorder %s20, 3
      %p59 = por %p57, %p58
      %p60 = scmp.ne.s32.totalorder %s51, %s52
      %p61 = scmp.eq.s32.totalorder %s20, 0
      %p62 = por %p60, %p61
      %p63 = scmp.ne.s32.totalorder %s51, %s52
      %p64 = scmp.eq.s32.totalorder %s21, 3
      %p65 = por %p63, %p64
      %p67 = scmp.ne.s32.totalorder %s52, %s66
      %p68 = scmp.eq.s32.totalorder %s21, 0
      %p69 = por %p67, %p68
      %s71 = sadd.s32 %s70, 1
      %p74 = scmp.eq.s32.totalorder %s15, 3
      %p75 = scmp.ne.s32.totalorder %s70, %s72
      %p76 = scmp.eq.s32.totalorder %s15, 0
      %p77 = por %p75, %p76
      %p78 = scmp.ne.s32.totalorder %s70, %s72
      %p79 = scmp.eq.s32.totalorder %s20, 3
      %p80 = por %p78, %p79
      %p81 = scmp.ne.s32.totalorder %s72, %s73
      %p82 = scmp.eq.s32.totalorder %s20, 0
      %p83 = por %p81, %p82
      %p84 = scmp.ne.s32.totalorder %s72, %s73
      %p85 = scmp.eq.s32.totalorder %s21, 3
      %p86 = por %p84, %p85
      %p88 = scmp.ne.s32.totalorder %s73, %s87
      %p89 = scmp.eq.s32.totalorder %s21, 0
      %p90 = por %p88, %p89
      %s91 = ssub.s32 %s15, %s22
      %p92 = scmp.eq.s32.totalorder %s91, 0
      %s94 = sadd.s32 %s93, 1
      %s95 = scalar_select %p92, %s93, %s94
      %p98 = pneg %p92
      %p99 = scmp.eq.s32.totalorder %s15, 3
      %p100 = por %p98, %p99
      %p101 = scmp.ne.s32.totalorder %s93, %s96
      %p102 = scmp.eq.s32.totalorder %s15, 0
      %p103 = por %p101, %p102
      %p104 = scmp.ne.s32.totalorder %s93, %s96
      %p105 = scmp.eq.s32.totalorder %s20, 3
      %p106 = por %p104, %p105
      %p107 = scmp.ne.s32.totalorder %s96, %s97
      %p108 = scmp.eq.s32.totalorder %s20, 0
      %p109 = por %p107, %p108
      %p110 = scmp.ne.s32.totalorder %s96, %s97
      %p111 = scmp.eq.s32.totalorder %s21, 3
      %p112 = por %p110, %p111
      %p114 = scmp.ne.s32.totalorder %s97, %s113
      %p115 = scmp.eq.s32.totalorder %s21, 0
      %p116 = por %p114, %p115
      %p117 = scmp.le.s32.totalorder 1, %s15
      %p118 = scmp.lt.s32.totalorder %s15, 5
      %p119 = pnand %p117, %p118
      %p120 = pneg %p119
      // Predicated region
      $region9: #{tpu_custom_call.1} parent=5 // pred_check
        _
      $region10: #{tpu_custom_call.1} parent=5 // pred_check_branch
        %122 = sbr.rel (%p119) target = $region12
      $region11: #{tpu_custom_call.1} parent=5 // pred_region
        %s123 = ssub.s32 %s15, 1
        // Predicated region
        $region13: #{tpu_custom_call.1} parent=11 // pred_check
          %p124 = pneg %p62
        $region14: #{tpu_custom_call.1} parent=11 // pred_check_branch
          %126 = sbr.rel (%p124) target = $region16
        $region15: #{tpu_custom_call.1} parent=11 // pred_region
          _
        $region16: #{tpu_custom_call.1} parent=11 // pred_fallthru
          _
        // Predicated region
        $region17: #{tpu_custom_call.1} parent=11 // pred_check
          %p127 = pneg %p83
        $region18: #{tpu_custom_call.1} parent=11 // pred_check_branch
          %129 = sbr.rel (%p127) target = $region20
        $region19: #{tpu_custom_call.1} parent=11 // pred_region
          _
        $region20: #{tpu_custom_call.1} parent=11 // pred_fallthru
          _
      $region12: #{tpu_custom_call.1} parent=5 // pred_fallthru
        _
      %p130 = scmp.lt.s32.totalorder %s15, 4
      // Predicated region
      $region21: #{tpu_custom_call.1} parent=5 // pred_check
        %p131 = pneg %p130
      $region22: #{tpu_custom_call.1} parent=5 // pred_check_branch
        %133 = sbr.rel (%p131) target = $region24
      $region23: #{tpu_custom_call.1} parent=5 // pred_region
        // Predicated region
        $region25: #{tpu_custom_call.1} parent=23 // pred_check
          %p134 = pneg %p35
        $region26: #{tpu_custom_call.1} parent=23 // pred_check_branch
          %136 = sbr.rel (%p134) target = $region28
        $region27: #{tpu_custom_call.1} parent=23 // pred_region
          %s137 = sand.u32 %s25, 1
          %s138 = scalar_lea.sflag [#allocation3], %s137
          %s139 = sand.u32 %s25, 1
          %s140 = smul.addr %s139, 32
          %s141 = scalar_lea.vmem [#allocation2], %s140
          %s142 = smul.u32 2, %s15
          %144 = vsyncadd %s138, 0
          %s145 = smul.addr %s142, 2
          %s146 = smul.addr %s145, 8
          %s147 = scalar_lea.hbm %s0, %s146
          %s148 = sshll.u32 %s147, 4
          %s149 = int_to_ptr.hbm [resolvable:$true] %s148
          %s150 = sshll.u32 %s141, 4
          %s151 = int_to_ptr.vmem [resolvable:$true] %s150
          %156 = dma.hbm_to_vmem [thread:$0]  %s149, 512, %s151, %s138, 128, 128, 8
        $region28: #{tpu_custom_call.1} parent=23 // pred_fallthru
          _
      $region24: #{tpu_custom_call.1} parent=5 // pred_fallthru
        _
      %p157 = scmp.le.s32.totalorder 1, %s15
      %p158 = scmp.lt.s32.totalorder %s15, 5
      %p159 = pnand %p157, %p158
      %p160 = pneg %p159
      // Predicated region
      $region29: #{tpu_custom_call.1} parent=5 // pred_check
        _
      $region30: #{tpu_custom_call.1} parent=5 // pred_check_branch
        %162 = sbr.rel (%p159) target = $region32
      $region31: #{tpu_custom_call.1} parent=5 // pred_region
        %s163 = ssub.s32 %s15, 1
        %s164 = sand.u32 %s28, 1
        %s165 = scalar_lea.sflag [#allocation3], %s164
        %s166 = sand.u32 %s28, 1
        %s167 = smul.addr %s166, 32
        %s168 = scalar_lea.vmem [#allocation2], %s167
        // Predicated region
        $region33: #{tpu_custom_call.1} parent=31 // pred_check
          %p169 = pneg %p41
        $region34: #{tpu_custom_call.1} parent=31 // pred_check_branch
          %171 = sbr.rel (%p169) target = $region36
        $region35: #{tpu_custom_call.1} parent=31 // pred_region
          %173 = dma.done %s165, 512
        $region36: #{tpu_custom_call.1} parent=31 // pred_fallthru
          _
        %s174 = sand.u32 %s28, 1
        %s175 = scalar_lea.sflag [#allocation3], %s174
        %s176 = sand.u32 %s28, 1
        %s177 = smul.addr %s176, 32
        %s178 = scalar_lea.vmem [#allocation2], %s177
        %p179 = pneg %p41
        %p180 = pneg %p38
        %p181 = pneg %p62
        %p182 = pneg %p59
        %p183 = pneg %p83
        %p184 = pneg %p80
        %p185 = pneg %p109
        %p186 = pneg %p106
        %s187 = sand.u32 %s96, 1
        %s188 = scalar_lea.sflag [#allocation4], %s187
        %s189 = sand.u32 %s96, 1
        %s190 = smul.addr %s189, 48
        %s191 = scalar_lea.vmem [#allocation5], %s190
        %s192 = smul.u32 2, %s20
        %s193 = smul.u32 2, %s20
        %v194 = vld [vmem:[%s1] sm:$0xff]
        %v195 = vld [vmem:[%s1 + $0x8] sm:$0xff]
        %v196 = vld [vmem:[%s1 + $0x10] sm:$0xff]
        %v197 = vld [vmem:[%s2] sm:$0xff]
        %v198 = vld [vmem:[%s2 + $0x8] sm:$0xff]
        %v199 = vld [vmem:[%s168] sm:$0xff]
        %v200 = vld [vmem:[%s168 + $0x8] sm:$0xff]
        %vm201 = vcmask 130048
        %v203 = vsel %vm201, %v199, 0
        %v206 = vsel %vm201, %v200, 0
        %208 = vmatpush.msra.mxu0 0.0
        %209 = vmatpush.msra.mxu0 0.0
        %210 = vmatpush.msra.mxu0 0.0
        %211 = vmatpush.msra.mxu0 0.0
        %212 = vmatpush.msra.mxu0 0.0
        %213 = vmatpush.msra.mxu0 0.0
        %214 = vmatpush.msra.mxu0 0.0
        %215 = vmatpush.msra.mxu0 0.0
        %216 = vmatpush.msra.mxu0 0.0
        %217 = vmatpush.msra.mxu0 0.0
        %218 = vmatpush.msra.mxu0 0.0
        %219 = vmatpush.msra.mxu0 0.0
        %220 = vmatpush.msra.mxu0 0.0
        %221 = vmatpush.msra.mxu0 0.0
        %222 = vmatpush.msra.mxu0 %v198
        %223 = vmatpush.msra.mxu0 %v197
        %224 = vmatmul.f32.gmra.mxu0 %v203
        %v225 = vpop.f32.mrf.mxu0
        %v226 = vadd.f32 0.0, %v225
        %227 = vmatmul.f32.gmra.mxu0 %v206
        %v228 = vpop.f32.mrf.mxu0
        %v229 = vadd.f32 0.0, %v228
        %230 = vdwg.mxu0
        %v232 = vsel %vm201, %v194, 0
        %v235 = vsel %vm201, %v195, 0
        %v238 = vsel %vm201, %v196, 0
        %240 = vmatpush.msra.mxu0 0.0
        %241 = vmatpush.msra.mxu0 0.0
        %242 = vmatpush.msra.mxu0 0.0
        %243 = vmatpush.msra.mxu0 0.0
        %244 = vmatpush.msra.mxu0 0.0
        %245 = vmatpush.msra.mxu0 0.0
        %246 = vmatpush.msra.mxu0 0.0
        %247 = vmatpush.msra.mxu0 0.0
        %248 = vmatpush.msra.mxu0 0.0
        %249 = vmatpush.msra.mxu0 0.0
        %250 = vmatpush.msra.mxu0 0.0
        %251 = vmatpush.msra.mxu0 0.0
        %252 = vmatpush.msra.mxu0 0.0
        %253 = vmatpush.msra.mxu0 0.0
        %254 = vmatpush.msra.mxu0 %v229
        %255 = vmatpush.msra.mxu0 %v226
        %256 = vmatmul.f32.gmra.mxu0 %v232
        %v257 = vpop.f32.mrf.mxu0
        %v258 = vadd.f32 0.0, %v257
        %259 = vmatmul.f32.gmra.mxu0 %v235
        %v260 = vpop.f32.mrf.mxu0
        %v261 = vadd.f32 0.0, %v260
        %262 = vmatmul.f32.gmra.mxu0 %v238
        %v263 = vpop.f32.mrf.mxu0
        %v264 = vadd.f32 0.0, %v263
        %265 = vdwg.mxu0
        %266 = vst [vmem:[%s191] sm:$0xff] %v258
        %267 = vst [vmem:[%s191 + $0x8] sm:$0xff] %v261
        %268 = vst [vmem:[%s191 + $0x10] sm:$0xff] %v264
        %s269 = scalar_lea.vmem %s168, 16 [#allocation2]
        %v270 = vld [vmem:[%s269] sm:$0xff]
        %v271 = vld [vmem:[%s269 + $0x8] sm:$0xff]
        %v273 = vsel %vm201, %v270, 0
        %v276 = vsel %vm201, %v271, 0
        %278 = vmatpush.msra.mxu0 0.0
        %279 = vmatpush.msra.mxu0 0.0
        %280 = vmatpush.msra.mxu0 0.0
        %281 = vmatpush.msra.mxu0 0.0
        %282 = vmatpush.msra.mxu0 0.0
        %283 = vmatpush.msra.mxu0 0.0
        %284 = vmatpush.msra.mxu0 0.0
        %285 = vmatpush.msra.mxu0 0.0
        %286 = vmatpush.msra.mxu0 0.0
        %287 = vmatpush.msra.mxu0 0.0
        %288 = vmatpush.msra.mxu0 0.0
        %289 = vmatpush.msra.mxu0 0.0
        %290 = vmatpush.msra.mxu0 0.0
        %291 = vmatpush.msra.mxu0 0.0
        %292 = vmatpush.msra.mxu0 %v198
        %293 = vmatpush.msra.mxu0 %v197
        %294 = vmatmul.f32.gmra.mxu0 %v273
        %v295 = vpop.f32.mrf.mxu0
        %v296 = vadd.f32 0.0, %v295
        %297 = vmatmul.f32.gmra.mxu0 %v276
        %v298 = vpop.f32.mrf.mxu0
        %v299 = vadd.f32 0.0, %v298
        %300 = vdwg.mxu0
        %301 = vmatpush.msra.mxu0 0.0
        %302 = vmatpush.msra.mxu0 0.0
        %303 = vmatpush.msra.mxu0 0.0
        %304 = vmatpush.msra.mxu0 0.0
        %305 = vmatpush.msra.mxu0 0.0
        %306 = vmatpush.msra.mxu0 0.0
        %307 = vmatpush.msra.mxu0 0.0
        %308 = vmatpush.msra.mxu0 0.0
        %309 = vmatpush.msra.mxu0 0.0
        %310 = vmatpush.msra.mxu0 0.0
        %311 = vmatpush.msra.mxu0 0.0
        %312 = vmatpush.msra.mxu0 0.0
        %313 = vmatpush.msra.mxu0 0.0
        %314 = vmatpush.msra.mxu0 0.0
        %315 = vmatpush.msra.mxu0 %v299
        %316 = vmatpush.msra.mxu0 %v296
        %317 = vmatmul.f32.gmra.mxu0 %v232
        %v318 = vpop.f32.mrf.mxu0
        %v319 = vadd.f32 0.0, %v318
        %320 = vmatmul.f32.gmra.mxu0 %v235
        %v321 = vpop.f32.mrf.mxu0
        %v322 = vadd.f32 0.0, %v321
        %323 = vmatmul.f32.gmra.mxu0 %v238
        %v324 = vpop.f32.mrf.mxu0
        %v325 = vadd.f32 0.0, %v324
        %326 = vdwg.mxu0
        %s327 = scalar_lea.vmem %s191, 24 [#allocation5]
        %328 = vst [vmem:[%s327] sm:$0xff] %v319
        %329 = vst [vmem:[%s327 + $0x8] sm:$0xff] %v322
        %330 = vst [vmem:[%s327 + $0x10] sm:$0xff] %v325
        %s331 = sand.u32 %s96, 1
        %s332 = scalar_lea.sflag [#allocation4], %s331
        %s333 = sand.u32 %s96, 1
        %s334 = smul.addr %s333, 48
        %s335 = scalar_lea.vmem [#allocation5], %s334
        // Predicated region
        $region37: #{tpu_custom_call.1} parent=31 // pred_check
          %p336 = pneg %p106
        $region38: #{tpu_custom_call.1} parent=31 // pred_check_branch
          %338 = sbr.rel (%p336) target = $region40
        $region39: #{tpu_custom_call.1} parent=31 // pred_region
          %s339 = smul.u32 2, %s20
          %341 = vsyncadd %s332, 0
          %s342 = smul.addr %s339, 3
          %s343 = smul.addr %s342, 8
          %s344 = scalar_lea.hbm %s3, %s343
          %s345 = sshll.u32 %s335, 4
          %s346 = int_to_ptr.vmem [resolvable:$true] %s345
          %s347 = sshll.u32 %s344, 4
          %s348 = int_to_ptr.hbm [resolvable:$true] %s347
          %353 = dma.vmem_to_hbm [thread:$0]  %s346, 768, %s348, %s332, 128, 128, 8
        $region40: #{tpu_custom_call.1} parent=31 // pred_fallthru
          _
      $region32: #{tpu_custom_call.1} parent=5 // pred_fallthru
        _
      %p354 = scmp.le.s32.totalorder 2, %s15
      // Predicated region
      $region41: #{tpu_custom_call.1} parent=5 // pred_check
        %p355 = pneg %p354
      $region42: #{tpu_custom_call.1} parent=5 // pred_check_branch
        %357 = sbr.rel (%p355) target = $region44
      $region43: #{tpu_custom_call.1} parent=5 // pred_region
        %s358 = ssub.s32 %s15, 2
        // Predicated region
        $region45: #{tpu_custom_call.1} parent=43 // pred_check
          %p359 = pneg %p112
        $region46: #{tpu_custom_call.1} parent=43 // pred_check_branch
          %361 = sbr.rel (%p359) target = $region48
        $region47: #{tpu_custom_call.1} parent=43 // pred_region
          %s362 = sand.u32 %s97, 1
          %s363 = scalar_lea.sflag [#allocation4], %s362
          %s364 = sand.u32 %s97, 1
          %s365 = smul.addr %s364, 48
          %s366 = scalar_lea.vmem [#allocation5], %s365
          %368 = dma.done %s363, 768
        $region48: #{tpu_custom_call.1} parent=43 // pred_fallthru
          _
      $region44: #{tpu_custom_call.1} parent=5 // pred_fallthru
        _
    $region6: #{tpu_custom_call.1} parent=1 // loop_footer
      %s19 = sadd.s32 1, %s15
    $region7: #{tpu_custom_call.1} parent=1 // loop_footer_branch
      %14 = sbr.rel target = $region3
    $region8: #{tpu_custom_call.1} parent=1 // loop_exit
      _
    %369 = vsyncpa [#allocation3], 1
    %s370 = scalar_lea.sflag [#allocation3], 1
    %371 = vsyncpa %s370, 1
    %372 = vsyncpa [#allocation4], 1
    %s373 = scalar_lea.sflag [#allocation4], 1
    %374 = vsyncpa %s373, 1

</llo_original>
